<compile_context>
chip_gen: v5e
topology: v5e:2x2
jax: 0.10.0
libtpu: 0.0.40
codegen_flags: <defaults>
</compile_context>

<pallas_src>
import functools

import jax
import jax.numpy as jnp
from jax.experimental import pallas as pl
from jax.experimental.pallas import tpu as pltpu

LANE = 128        # lane width: last-dim alignment
SUBLANE = 8       # f32 sublane width (batch-tile alignment)
BF16_SUBLANE = 16 # bf16 sublane packing (layer-0 K alignment)


def _round_up(v, m):
    return ((v + m - 1) // m) * m


def _choose_tm(Mp):
    """Largest multiple-of-8 tile that divides Mp, <= 512, and gives >= 2 grid
    steps when Mp >= 16 (so both v7x TensorCores get work)."""
    if Mp < 16:
        return Mp
    cap = min(512, Mp // 2)
    best = SUBLANE
    t = SUBLANE
    while t <= cap:
        if Mp % t == 0:
            best = t
        t += SUBLANE
    return best


# ----------------------------------------------------------------------------
# Fused MLP kernel.  One (tm, K0p) batch tile of x in, one (tm, Nlast_p) tile
# of the final output.  All weights/biases are full-array resident refs.
# ----------------------------------------------------------------------------
def _fused_mlp_kernel(*refs, num_layers):
    # refs = (x_ref, w0, b0, w1, b1, ..., w_{L-1}, b_{L-1}, o_ref)
    x_ref = refs[0]
    o_ref = refs[-1]
    wb = refs[1:-1]

    h = x_ref[...].astype(jnp.float32)          # elementwise path stays f32
    for li in range(num_layers):
        w = wb[2 * li][...]                      # (K_li_p, N_li_p) bf16, resident
        b = wb[2 * li + 1][...]                  # (1, N_li_p) f32 -> broadcast
        # bf16 MXU inputs, f32 accumulation; bias add + ReLU in f32.
        h = jnp.dot(h.astype(jnp.bfloat16), w,
                    preferred_element_type=jnp.float32) + b
        if li < num_layers - 1:                  # ReLU on hidden layers only
            h = jnp.maximum(h, 0.0)
    o_ref[...] = h.astype(o_ref.dtype)


# ----------------------------------------------------------------------------
# Parameter init (mimics nn.Linear default uniform +-1/sqrt(fan_in)) and
# one-time padding/cast to lane-aligned bf16 shapes.
# ----------------------------------------------------------------------------
def init_generator_params(key, latent_dim, hidden_dimensions, data_dim):
    dims = [latent_dim] + list(hidden_dimensions) + [data_dim]
    params = []
    for i in range(1, len(dims)):
        fan_in, fan_out = dims[i - 1], dims[i]
        key, kw, kb = jax.random.split(key, 3)
        bound = 1.0 / jnp.sqrt(fan_in)
        w = jax.random.uniform(kw, (fan_in, fan_out), jnp.float32, -bound, bound)
        b = jax.random.uniform(kb, (fan_out,), jnp.float32, -bound, bound)
        params.append((w, b))
    return params


def pad_generator_params(params):
    """Zero-pad + cast each (w, b) ONCE (hoisted out of the forward pass).

    Layer 0: K padded only to the bf16 sublane multiple (16) -> typically no
    padding of x is needed at all.  Interior layers: Kp == previous Np (128).
    All N padded to 128 (lane-dense output of every layer).  Weights stored as
    bf16 (MXU inputs), biases as f32 (bias add stays f32).

    Zero padding is numerically exact: padded hidden columns are relu(0+0)=0
    and feed zero weight rows downstream; padded bias entries are exactly 0.
    """
    padded = []
    prev_np = None
    for idx, (w, b) in enumerate(params):
        K, N = w.shape
        if idx == 0:
            Kp = _round_up(K, BF16_SUBLANE)
        else:
            Kp = prev_np                       # == round_up(K, 128) since K == prev N
        Np = _round_up(N, LANE)
        w_p = jnp.zeros((Kp, Np), jnp.bfloat16).at[:K, :N].set(w.astype(jnp.bfloat16))
        b_p = jnp.zeros((1, Np), jnp.float32).at[0, :N].set(b)
        padded.append((w_p, b_p))
        prev_np = Np
    return padded


# ----------------------------------------------------------------------------
# Forward pass: one pallas_call, grid over batch only, weights resident.
# ----------------------------------------------------------------------------
def generator_forward_padded(x, padded_params):
    """Returns the lane-dense padded output (Mp, Nlast_p).  Preferred API for
    training: downstream consumers should take this directly instead of
    forcing an extra XLA slice-copy."""
    M, K = x.shape
    K0p = padded_params[0][0].shape[0]
    Nlast_p = padded_params[-1][0].shape[1]
    num_layers = len(padded_params)

    Mp = _round_up(M, SUBLANE)
    tm = _choose_tm(Mp)                         # divides Mp; >=2 steps when Mp>=16

    # x needs padding only if the batch is not a multiple of 8 or latent_dim is
    # not a multiple of 16; with latent_dim=16 and batch%8==0 this is a no-op.
    if (Mp, K0p) != (M, K):
        x_p = jnp.zeros((Mp, K0p), x.dtype).at[:M, :K].set(x)
    else:
        x_p = x

    in_specs = [pl.BlockSpec((tm, K0p), lambda i: (i, 0))]
    flat_wb = []
    for w_p, b_p in padded_params:
        Kp, Np = w_p.shape
        # Full-array, grid-invariant blocks -> stay resident in VMEM across
        # grid steps (total ~70 KiB bf16 here; trivially fits v7x's 64 MiB).
        in_specs.append(pl.BlockSpec((Kp, Np), lambda i: (0, 0)))
        in_specs.append(pl.BlockSpec((1, Np), lambda i: (0, 0)))
        flat_wb.extend([w_p, b_p])

    out = pl.pallas_call(
        functools.partial(_fused_mlp_kernel, num_layers=num_layers),
        out_shape=jax.ShapeDtypeStruct((Mp, Nlast_p), x.dtype),
        grid_spec=pltpu.PrefetchScalarGridSpec(
            num_scalar_prefetch=0,
            grid=(Mp // tm,),
            in_specs=in_specs,
            out_specs=pl.BlockSpec((tm, Nlast_p), lambda i: (i, 0)),
        ),
        compiler_params=pltpu.CompilerParams(
            dimension_semantics=("parallel",),
        ),
    )(x_p, *flat_wb)
    return out


def generator_apply(x, padded_params, data_dim):
    """Convenience wrapper returning the exact (M, data_dim) output.  In a
    training loop prefer generator_forward_padded and let the consumer accept
    the padded slab (the trim is a separate XLA copy kernel)."""
    out_p = generator_forward_padded(x, padded_params)
    return out_p[: x.shape[0], :data_dim]


# ----------------------------------------------------------------------------
# Pure-JAX f32 reference (unpadded params).
# ----------------------------------------------------------------------------
def generator_ref(x, params):
    for w, b in params[:-1]:
        x = jnp.maximum(x @ w + b, 0.0)
    w, b = params[-1]
    return x @ w + b


if __name__ == "__main__":
    latent_dim = 16
    hidden_dimensions = [32, 64]
    data_dim = 24
    batch = 8

    key = jax.random.PRNGKey(0)
    key, kx = jax.random.split(key)
    x = jax.random.normal(kx, (batch, latent_dim), jnp.float32)

    params = init_generator_params(key, latent_dim, hidden_dimensions, data_dim)
    padded_params = pad_generator_params(params)   # padded+cast once, reused

    # Primary (padded, lane-dense) forward: no per-call input pad, no trim.
    fwd = jax.jit(generator_forward_padded)
    out_p = jax.block_until_ready(fwd(x, padded_params))

    # Test-only trim for comparison against the f32 reference.
    y = out_p[:batch, :data_dim]
    y_ref = generator_ref(x, params)

    assert out_p.shape == (batch, _round_up(data_dim, LANE))
    assert y.shape == (batch, data_dim)
    # bf16 MXU inputs (f32 accumulate) -> ~1e-2-level deviation from the pure
    # f32 reference; tolerance relaxed accordingly.
    assert jnp.allclose(y, y_ref, atol=5e-2, rtol=5e-2), "mismatch vs reference"

    print("KERNEL_OK")
</pallas_src>

<mosaic_0001>
module attributes {stable_mosaic.version = 11 : i64} {
  func.func @_fused_mlp_kernel(%arg0: i32, %arg1: memref<8x16xf32, #tpu.memory_space<vmem>>, %arg2: memref<16x128xbf16, #tpu.memory_space<vmem>>, %arg3: memref<1x128xf32, #tpu.memory_space<vmem>>, %arg4: memref<128x128xbf16, #tpu.memory_space<vmem>>, %arg5: memref<1x128xf32, #tpu.memory_space<vmem>>, %arg6: memref<128x128xbf16, #tpu.memory_space<vmem>>, %arg7: memref<1x128xf32, #tpu.memory_space<vmem>>, %arg8: memref<8x128xf32, #tpu.memory_space<vmem>>) attributes {dimension_semantics = [#tpu.dimension_semantics<parallel>], iteration_bounds = array<i64: 1>, scalar_prefetch = 0 : i64, scratch_operands = 0 : i64, tpu.core_type = #tpu.core_type<tc>, window_params = [{transform_indices = @transform_0, window_bounds = array<i64: 8, 16>}, {pipeline_mode = #tpu.pipeline_mode<synchronous>, transform_indices = @transform_1, window_bounds = array<i64: 16, 128>}, {pipeline_mode = #tpu.pipeline_mode<synchronous>, transform_indices = @transform_2, window_bounds = array<i64: 1, 128>}, {pipeline_mode = #tpu.pipeline_mode<synchronous>, transform_indices = @transform_3, window_bounds = array<i64: 128, 128>}, {pipeline_mode = #tpu.pipeline_mode<synchronous>, transform_indices = @transform_4, window_bounds = array<i64: 1, 128>}, {pipeline_mode = #tpu.pipeline_mode<synchronous>, transform_indices = @transform_5, window_bounds = array<i64: 128, 128>}, {pipeline_mode = #tpu.pipeline_mode<synchronous>, transform_indices = @transform_6, window_bounds = array<i64: 1, 128>}, {transform_indices = @transform_7, window_bounds = array<i64: 8, 128>}]} {
    %c0 = arith.constant 0 : index
    %c0_0 = arith.constant 0 : index
    %0 = vector.load %arg1[%c0, %c0_0] : memref<8x16xf32, #tpu.memory_space<vmem>>, vector<8x16xf32>
    %c0_1 = arith.constant 0 : index
    %c0_2 = arith.constant 0 : index
    %1 = vector.load %arg2[%c0_1, %c0_2] : memref<16x128xbf16, #tpu.memory_space<vmem>>, vector<16x128xbf16>
    %c0_3 = arith.constant 0 : index
    %c0_4 = arith.constant 0 : index
    %2 = vector.load %arg3[%c0_3, %c0_4] : memref<1x128xf32, #tpu.memory_space<vmem>>, vector<1x128xf32>
    %3 = arith.truncf %0 : vector<8x16xf32> to vector<8x16xbf16>
    %cst = arith.constant dense<0.000000e+00> : vector<8x128xf32>
    %4 = tpu.matmul %3, %1, %cst {dimension_numbers = #tpu.dot_dimension_numbers<[1], [0], [0], [1], [0, 0, 1, 1], [], []>} : vector<8x16xbf16>, vector<16x128xbf16>, vector<8x128xf32> -> vector<8x128xf32>
    %5 = vector.broadcast %2 : vector<1x128xf32> to vector<8x128xf32>
    %6 = arith.addf %4, %5 : vector<8x128xf32>
    %cst_5 = arith.constant 0.000000e+00 : f32
    %7 = vector.broadcast %cst_5 : f32 to vector<8x128xf32>
    %8 = arith.maximumf %6, %7 : vector<8x128xf32>
    %c0_6 = arith.constant 0 : index
    %c0_7 = arith.constant 0 : index
    %9 = vector.load %arg4[%c0_6, %c0_7] : memref<128x128xbf16, #tpu.memory_space<vmem>>, vector<128x128xbf16>
    %c0_8 = arith.constant 0 : index
    %c0_9 = arith.constant 0 : index
    %10 = vector.load %arg5[%c0_8, %c0_9] : memref<1x128xf32, #tpu.memory_space<vmem>>, vector<1x128xf32>
    %11 = arith.truncf %8 : vector<8x128xf32> to vector<8x128xbf16>
    %cst_10 = arith.constant dense<0.000000e+00> : vector<8x128xf32>
    %12 = tpu.matmul %11, %9, %cst_10 {dimension_numbers = #tpu.dot_dimension_numbers<[1], [0], [0], [1], [0, 0, 1, 1], [], []>} : vector<8x128xbf16>, vector<128x128xbf16>, vector<8x128xf32> -> vector<8x128xf32>
    %13 = vector.broadcast %10 : vector<1x128xf32> to vector<8x128xf32>
    %14 = arith.addf %12, %13 : vector<8x128xf32>
    %cst_11 = arith.constant 0.000000e+00 : f32
    %15 = vector.broadcast %cst_11 : f32 to vector<8x128xf32>
    %16 = arith.maximumf %14, %15 : vector<8x128xf32>
    %c0_12 = arith.constant 0 : index
    %c0_13 = arith.constant 0 : index
    %17 = vector.load %arg6[%c0_12, %c0_13] : memref<128x128xbf16, #tpu.memory_space<vmem>>, vector<128x128xbf16>
    %c0_14 = arith.constant 0 : index
    %c0_15 = arith.constant 0 : index
    %18 = vector.load %arg7[%c0_14, %c0_15] : memref<1x128xf32, #tpu.memory_space<vmem>>, vector<1x128xf32>
    %19 = arith.truncf %16 : vector<8x128xf32> to vector<8x128xbf16>
    %cst_16 = arith.constant dense<0.000000e+00> : vector<8x128xf32>
    %20 = tpu.matmul %19, %17, %cst_16 {dimension_numbers = #tpu.dot_dimension_numbers<[1], [0], [0], [1], [0, 0, 1, 1], [], []>} : vector<8x128xbf16>, vector<128x128xbf16>, vector<8x128xf32> -> vector<8x128xf32>
    %21 = vector.broadcast %18 : vector<1x128xf32> to vector<8x128xf32>
    %22 = arith.addf %20, %21 : vector<8x128xf32>
    %c0_17 = arith.constant 0 : index
    %c0_18 = arith.constant 0 : index
    %23 = vector.load %arg8[%c0_17, %c0_18] : memref<8x128xf32, #tpu.memory_space<vmem>>, vector<8x128xf32>
    tpu.vector_store %arg8[%c0_17, %c0_18], %22 {strides = array<i32>} : memref<8x128xf32, #tpu.memory_space<vmem>>, vector<8x128xf32>,
    return
  }
  func.func @transform_0(%arg0: i32) -> (i32, i32) {
    %c0_i32 = arith.constant 0 : i32
    %c0_i32_0 = arith.constant 0 : i32
    return %arg0, %c0_i32 : i32, i32
  }
  func.func @transform_1(%arg0: i32) -> (i32, i32) {
    %c0_i32 = arith.constant 0 : i32
    %c0_i32_0 = arith.constant 0 : i32
    %c0_i32_1 = arith.constant 0 : i32
    return %c0_i32, %c0_i32_0 : i32, i32
  }
  func.func @transform_2(%arg0: i32) -> (i32, i32) {
    %c0_i32 = arith.constant 0 : i32
    %c0_i32_0 = arith.constant 0 : i32
    %c0_i32_1 = arith.constant 0 : i32
    return %c0_i32, %c0_i32_0 : i32, i32
  }
  func.func @transform_3(%arg0: i32) -> (i32, i32) {
    %c0_i32 = arith.constant 0 : i32
    %c0_i32_0 = arith.constant 0 : i32
    %c0_i32_1 = arith.constant 0 : i32
    return %c0_i32, %c0_i32_0 : i32, i32
  }
  func.func @transform_4(%arg0: i32) -> (i32, i32) {
    %c0_i32 = arith.constant 0 : i32
    %c0_i32_0 = arith.constant 0 : i32
    %c0_i32_1 = arith.constant 0 : i32
    return %c0_i32, %c0_i32_0 : i32, i32
  }
  func.func @transform_5(%arg0: i32) -> (i32, i32) {
    %c0_i32 = arith.constant 0 : i32
    %c0_i32_0 = arith.constant 0 : i32
    %c0_i32_1 = arith.constant 0 : i32
    return %c0_i32, %c0_i32_0 : i32, i32
  }
  func.func @transform_6(%arg0: i32) -> (i32, i32) {
    %c0_i32 = arith.constant 0 : i32
    %c0_i32_0 = arith.constant 0 : i32
    %c0_i32_1 = arith.constant 0 : i32
    return %c0_i32, %c0_i32_0 : i32, i32
  }
  func.func @transform_7(%arg0: i32) -> (i32, i32) {
    %c0_i32 = arith.constant 0 : i32
    %c0_i32_0 = arith.constant 0 : i32
    return %arg0, %c0_i32 : i32, i32
  }
}

</mosaic_0001>

<llo_original>
// kernel: generator_forward_padded.1
$region0: #{generator_forward_padded.1}
  #allocation0 [shape = 'u32[]', space=smem, size = 0x4, offset = 0x4, fixed_abs, tag = 'smem constant byte address 0x4 - core index']
  #allocation1 [shape = 'u32[72,128]{1,0:T(1,128)}', space=vmem, size = 0x9000, scoped, tag = 'internal scratch']
  %s0 = inlined_call_operand.hbm [shape: f32[8,16], index: 0, kind: input, shape index: {}]
  %s1 = inlined_call_operand.hbm [shape: bf16[16,128], index: 1, kind: input, shape index: {}]
  %s2 = inlined_call_operand.vmem [shape: f32[1,128], index: 2, kind: input, shape index: {}]
  %s3 = inlined_call_operand.hbm [shape: bf16[128,128], index: 3, kind: input, shape index: {}]
  %s4 = inlined_call_operand.vmem [shape: f32[1,128], index: 4, kind: input, shape index: {}]
  %s5 = inlined_call_operand.hbm [shape: bf16[128,128], index: 5, kind: input, shape index: {}]
  %s6 = inlined_call_operand.vmem [shape: f32[1,128], index: 6, kind: input, shape index: {}]
  %s7 = inlined_call_operand.hbm [shape: f32[8,128], index: 7, kind: output, shape index: {}]
  %s8 = sld [smem:[#allocation0]]
  $region54: #{generator_forward_padded.1} parent=0
    _
  %s10 = ssub.s32 1, %s8
  %s11 = scalar_select 0, %s10, %s8
  $region1: #{generator_forward_padded.1} parent=0
    #allocation2 [shape = 'u8[4096]{0}', space=vmem, size = 0x1000, scoped, tag = 'input window, operand 0, single buffered']
    #allocation3 [shape = 's32[1]{0}', space=sflag, size = 0x4, scoped, tag = 'scoped memory for generator_forward_padded.1']
    #allocation4 [shape = 's32[1]{0}', space=sflag, size = 0x4, scoped, tag = 'scoped memory for generator_forward_padded.1']
    #allocation5 [shape = 'u8[4096]{0}', space=vmem, size = 0x1000, scoped, tag = 'input window, operand 1, single buffered']
    #allocation6 [shape = 's32[1]{0}', space=sflag, size = 0x4, scoped, tag = 'scoped memory for generator_forward_padded.1']
    #allocation7 [shape = 'u8[32768]{0}', space=vmem, size = 0x8000, scoped, tag = 'input window, operand 3, single buffered']
    #allocation8 [shape = 'u8[32768]{0}', space=vmem, size = 0x8000, scoped, tag = 'input window, operand 5, single buffered']
    #allocation9 [shape = 's32[1]{0}', space=sflag, size = 0x4, scoped, tag = 'scoped memory for generator_forward_padded.1']
    #allocation10 [shape = 'u8[4096]{0}', space=vmem, size = 0x1000, scoped, tag = 'output window, operand 0, single buffered']
    %12 = vsyncpa [#allocation3], 0
    %13 = vsyncpa [#allocation6], 0
    %14 = vsyncpa [#allocation9], 0
    %15 = vsyncpa [#allocation4], 0
    // Predicated region
    $region2: #{generator_forward_padded.1} parent=1 // pred_check
      _
    $region3: #{generator_forward_padded.1} parent=1 // pred_check_branch
      %17 = sbr.rel (0) target = $region5
    $region4: #{generator_forward_padded.1} parent=1 // pred_region
      %19 = vsyncadd [#allocation3], 0
      %s21 = sshll.u32 %s0, 4
      %s22 = int_to_ptr.hbm [resolvable:$true] %s21
      %s23 = sshll.u32 [#allocation2], 4
      %s24 = int_to_ptr.vmem [resolvable:$true] %s23
      %26 = dma.hbm_to_vmem [thread:$0]  %s22, 128, %s24, [#allocation3]
    $region5: #{generator_forward_padded.1} parent=1 // pred_fallthru
      _
    // Predicated region
    $region6: #{generator_forward_padded.1} parent=1 // pred_check
      _
    $region7: #{generator_forward_padded.1} parent=1 // pred_check_branch
      %28 = sbr.rel (0) target = $region9
    $region8: #{generator_forward_padded.1} parent=1 // pred_region
      %30 = vsyncadd [#allocation6], 0
      %s31 = sshll.u32 %s1, 4
      %s32 = int_to_ptr.hbm [resolvable:$true] %s31
      %s33 = sshll.u32 [#allocation5], 4
      %s34 = int_to_ptr.vmem [resolvable:$true] %s33
      %39 = dma.hbm_to_vmem [thread:$0]  %s32, 128, %s34, [#allocation6], 64, 64, 4
    $region9: #{generator_forward_padded.1} parent=1 // pred_fallthru
      _
    // Predicated region
    $region10: #{generator_forward_padded.1} parent=1 // pred_check
      _
    $region11: #{generator_forward_padded.1} parent=1 // pred_check_branch
      %41 = sbr.rel (0) target = $region13
    $region12: #{generator_forward_padded.1} parent=1 // pred_region
      _
    $region13: #{generator_forward_padded.1} parent=1 // pred_fallthru
      _
    // Predicated region
    $region14: #{generator_forward_padded.1} parent=1 // pred_check
      _
    $region15: #{generator_forward_padded.1} parent=1 // pred_check_branch
      %43 = sbr.rel (0) target = $region17
    $region16: #{generator_forward_padded.1} parent=1 // pred_region
      %45 = vsyncadd [#allocation6], 0
      %s46 = sshll.u32 %s3, 4
      %s47 = int_to_ptr.hbm [resolvable:$true] %s46
      %s48 = sshll.u32 [#allocation7], 4
      %s49 = int_to_ptr.vmem [resolvable:$true] %s48
      %54 = dma.hbm_to_vmem [thread:$0]  %s47, 1024, %s49, [#allocation6], 64, 64, 4
    $region17: #{generator_forward_padded.1} parent=1 // pred_fallthru
      _
    // Predicated region
    $region18: #{generator_forward_padded.1} parent=1 // pred_check
      _
    $region19: #{generator_forward_padded.1} parent=1 // pred_check_branch
      %56 = sbr.rel (0) target = $region21
    $region20: #{generator_forward_padded.1} parent=1 // pred_region
      _
    $region21: #{generator_forward_padded.1} parent=1 // pred_fallthru
      _
    // Predicated region
    $region22: #{generator_forward_padded.1} parent=1 // pred_check
      _
    $region23: #{generator_forward_padded.1} parent=1 // pred_check_branch
      %58 = sbr.rel (0) target = $region25
    $region24: #{generator_forward_padded.1} parent=1 // pred_region
      %60 = vsyncadd [#allocation9], 0
      %s61 = sshll.u32 %s5, 4
      %s62 = int_to_ptr.hbm [resolvable:$true] %s61
      %s63 = sshll.u32 [#allocation8], 4
      %s64 = int_to_ptr.vmem [resolvable:$true] %s63
      %69 = dma.hbm_to_vmem [thread:$0]  %s62, 1024, %s64, [#allocation9], 64, 64, 4
    $region25: #{generator_forward_padded.1} parent=1 // pred_fallthru
      _
    // Predicated region
    $region26: #{generator_forward_padded.1} parent=1 // pred_check
      _
    $region27: #{generator_forward_padded.1} parent=1 // pred_check_branch
      %71 = sbr.rel (0) target = $region29
    $region28: #{generator_forward_padded.1} parent=1 // pred_region
      _
    $region29: #{generator_forward_padded.1} parent=1 // pred_fallthru
      _
    // Predicated region
    $region30: #{generator_forward_padded.1} parent=1 // pred_check
      _
    $region31: #{generator_forward_padded.1} parent=1 // pred_check_branch
      %73 = sbr.rel (0) target = $region33
    $region32: #{generator_forward_padded.1} parent=1 // pred_region
      %75 = dma.done [#allocation3], 128
    $region33: #{generator_forward_padded.1} parent=1 // pred_fallthru
      _
    // Predicated region
    $region34: #{generator_forward_padded.1} parent=1 // pred_check
      _
    $region35: #{generator_forward_padded.1} parent=1 // pred_check_branch
      %77 = sbr.rel (0) target = $region37
    $region36: #{generator_forward_padded.1} parent=1 // pred_region
      %79 = dma.done [#allocation6], 128
    $region37: #{generator_forward_padded.1} parent=1 // pred_fallthru
      _
    // Predicated region
    $region38: #{generator_forward_padded.1} parent=1 // pred_check
      _
    $region39: #{generator_forward_padded.1} parent=1 // pred_check_branch
      %81 = sbr.rel (0) target = $region41
    $region40: #{generator_forward_padded.1} parent=1 // pred_region
      %83 = dma.done [#allocation6], 1024
    $region41: #{generator_forward_padded.1} parent=1 // pred_fallthru
      _
    // Predicated region
    $region42: #{generator_forward_padded.1} parent=1 // pred_check
      _
    $region43: #{generator_forward_padded.1} parent=1 // pred_check_branch
      %85 = sbr.rel (0) target = $region45
    $region44: #{generator_forward_padded.1} parent=1 // pred_region
      %87 = dma.done [#allocation9], 1024
    $region45: #{generator_forward_padded.1} parent=1 // pred_fallthru
      _
    %v89 = vld [vmem:[#allocation2] sm:$0xff]
    %v90 = vld [vmem:[#allocation5] sm:$0xf]
    %v91 = vld [vmem:[#allocation5 + $0x4] sm:$0xf]
    %v92 = vld [vmem:[%s2] sm:$0x1]
    %v93 = vpack.c.bf16 %v89, %v89
    %v95 = vperm.slane %v92, 0
    %v99 = vunpack.c.l.b16 %v90
    %v100 = vunpack.c.l.b16 %v91
    %v101 = vpack.c.b16 %v100, %v99
    %vm103 = vcmask 130048
    %v105 = vsel %vm103, %v93, 0
    %107 = vmatpush.bf16.msra.mxu0 0
    %108 = vmatpush.bf16.msra.mxu0 0
    %109 = vmatpush.bf16.msra.mxu0 0
    %110 = vmatpush.bf16.msra.mxu0 0
    %111 = vmatpush.bf16.msra.mxu0 0
    %112 = vmatpush.bf16.msra.mxu0 0
    %113 = vmatpush.bf16.msra.mxu0 0
    %114 = vmatpush.bf16.msra.mxu0 %v101
    %115 = vmatmul.bf16.gmra.mxu0 %v105
    %v116 = vpop.f32.mrf.mxu0
    %v117 = vadd.f32 %v95, %v116
    %v118 = vpop.f32.mrf.mxu0
    %119 = vdwg.mxu0
    %v120 = vmax.f32 %v117, 0.0
    %v121 = vld [vmem:[#allocation7] sm:$0xf]
    %v122 = vld [vmem:[#allocation7 + $0x4] sm:$0xf]
    %v123 = vld [vmem:[#allocation7 + $0x8] sm:$0xf]
    %v124 = vld [vmem:[#allocation7 + $0xc] sm:$0xf]
    %v125 = vld [vmem:[#allocation7 + $0x10] sm:$0xf]
    %v126 = vld [vmem:[#allocation7 + $0x14] sm:$0xf]
    %v127 = vld [vmem:[#allocation7 + $0x18] sm:$0xf]
    %v128 = vld [vmem:[#allocation7 + $0x1c] sm:$0xf]
    %v129 = vld [vmem:[#allocation7 + $0x20] sm:$0xf]
    %v130 = vld [vmem:[#allocation7 + $0x24] sm:$0xf]
    %v131 = vld [vmem:[#allocation7 + $0x28] sm:$0xf]
    %v132 = vld [vmem:[#allocation7 + $0x2c] sm:$0xf]
    %v133 = vld [vmem:[#allocation7 + $0x30] sm:$0xf]
    %v134 = vld [vmem:[#allocation7 + $0x34] sm:$0xf]
    %v135 = vld [vmem:[#allocation7 + $0x38] sm:$0xf]
    %v136 = vld [vmem:[#allocation7 + $0x3c] sm:$0xf]
    %v137 = vld [vmem:[%s4] sm:$0x1]
    %v138 = vpack.c.bf16 %v120, %v120
    %v140 = vperm.slane %v137, 0
    %v158 = vunpack.c.l.b16 %v121
    %v159 = vunpack.c.l.b16 %v122
    %v160 = vunpack.c.l.b16 %v123
    %v161 = vunpack.c.l.b16 %v124
    %v162 = vunpack.c.l.b16 %v125
    %v163 = vunpack.c.l.b16 %v126
    %v164 = vunpack.c.l.b16 %v127
    %v165 = vunpack.c.l.b16 %v128
    %v166 = vunpack.c.l.b16 %v129
    %v167 = vunpack.c.l.b16 %v130
    %v168 = vunpack.c.l.b16 %v131
    %v169 = vunpack.c.l.b16 %v132
    %v170 = vunpack.c.l.b16 %v133
    %v171 = vunpack.c.l.b16 %v134
    %v172 = vunpack.c.l.b16 %v135
    %v173 = vunpack.c.l.b16 %v136
    %v174 = vpack.c.b16 %v159, %v158
    %v175 = vpack.c.b16 %v161, %v160
    %v176 = vpack.c.b16 %v163, %v162
    %v177 = vpack.c.b16 %v165, %v164
    %v178 = vpack.c.b16 %v167, %v166
    %v179 = vpack.c.b16 %v169, %v168
    %v180 = vpack.c.b16 %v171, %v170
    %v181 = vpack.c.b16 %v173, %v172
    %190 = vmatpush.bf16.msra.mxu0 %v181
    %191 = vmatpush.bf16.msra.mxu0 %v180
    %192 = vmatpush.bf16.msra.mxu0 %v179
    %193 = vmatpush.bf16.msra.mxu0 %v178
    %194 = vmatpush.bf16.msra.mxu0 %v177
    %195 = vmatpush.bf16.msra.mxu0 %v176
    %196 = vmatpush.bf16.msra.mxu0 %v175
    %197 = vmatpush.bf16.msra.mxu0 %v174
    %198 = vmatmul.bf16.gmra.mxu0 %v138
    %v199 = vpop.f32.mrf.mxu0
    %v200 = vadd.f32 %v140, %v199
    %v201 = vpop.f32.mrf.mxu0
    %202 = vdwg.mxu0
    %v203 = vmax.f32 %v200, 0.0
    %v204 = vld [vmem:[#allocation8] sm:$0xf]
    %v205 = vld [vmem:[#allocation8 + $0x4] sm:$0xf]
    %v206 = vld [vmem:[#allocation8 + $0x8] sm:$0xf]
    %v207 = vld [vmem:[#allocation8 + $0xc] sm:$0xf]
    %v208 = vld [vmem:[#allocation8 + $0x10] sm:$0xf]
    %v209 = vld [vmem:[#allocation8 + $0x14] sm:$0xf]
    %v210 = vld [vmem:[#allocation8 + $0x18] sm:$0xf]
    %v211 = vld [vmem:[#allocation8 + $0x1c] sm:$0xf]
    %v212 = vld [vmem:[#allocation8 + $0x20] sm:$0xf]
    %v213 = vld [vmem:[#allocation8 + $0x24] sm:$0xf]
    %v214 = vld [vmem:[#allocation8 + $0x28] sm:$0xf]
    %v215 = vld [vmem:[#allocation8 + $0x2c] sm:$0xf]
    %v216 = vld [vmem:[#allocation8 + $0x30] sm:$0xf]
    %v217 = vld [vmem:[#allocation8 + $0x34] sm:$0xf]
    %v218 = vld [vmem:[#allocation8 + $0x38] sm:$0xf]
    %v219 = vld [vmem:[#allocation8 + $0x3c] sm:$0xf]
    %v220 = vld [vmem:[%s6] sm:$0x1]
    %v221 = vpack.c.bf16 %v203, %v203
    %v223 = vperm.slane %v220, 0
    %v241 = vunpack.c.l.b16 %v204
    %v242 = vunpack.c.l.b16 %v205
    %v243 = vunpack.c.l.b16 %v206
    %v244 = vunpack.c.l.b16 %v207
    %v245 = vunpack.c.l.b16 %v208
    %v246 = vunpack.c.l.b16 %v209
    %v247 = vunpack.c.l.b16 %v210
    %v248 = vunpack.c.l.b16 %v211
    %v249 = vunpack.c.l.b16 %v212
    %v250 = vunpack.c.l.b16 %v213
    %v251 = vunpack.c.l.b16 %v214
    %v252 = vunpack.c.l.b16 %v215
    %v253 = vunpack.c.l.b16 %v216
    %v254 = vunpack.c.l.b16 %v217
    %v255 = vunpack.c.l.b16 %v218
    %v256 = vunpack.c.l.b16 %v219
    %v257 = vpack.c.b16 %v242, %v241
    %v258 = vpack.c.b16 %v244, %v243
    %v259 = vpack.c.b16 %v246, %v245
    %v260 = vpack.c.b16 %v248, %v247
    %v261 = vpack.c.b16 %v250, %v249
    %v262 = vpack.c.b16 %v252, %v251
    %v263 = vpack.c.b16 %v254, %v253
    %v264 = vpack.c.b16 %v256, %v255
    %273 = vmatpush.bf16.msra.mxu0 %v264
    %274 = vmatpush.bf16.msra.mxu0 %v263
    %275 = vmatpush.bf16.msra.mxu0 %v262
    %276 = vmatpush.bf16.msra.mxu0 %v261
    %277 = vmatpush.bf16.msra.mxu0 %v260
    %278 = vmatpush.bf16.msra.mxu0 %v259
    %279 = vmatpush.bf16.msra.mxu0 %v258
    %280 = vmatpush.bf16.msra.mxu0 %v257
    %281 = vmatmul.bf16.gmra.mxu0 %v221
    %v282 = vpop.f32.mrf.mxu0
    %v283 = vadd.f32 %v223, %v282
    %v284 = vpop.f32.mrf.mxu0
    %285 = vdwg.mxu0
    %286 = vst [vmem:[#allocation10] sm:$0xff] %v283
    // Predicated region
    $region46: #{generator_forward_padded.1} parent=1 // pred_check
      _
    $region47: #{generator_forward_padded.1} parent=1 // pred_check_branch
      %288 = sbr.rel (0) target = $region49
    $region48: #{generator_forward_padded.1} parent=1 // pred_region
      %290 = vsyncadd [#allocation4], 0
      %s292 = sshll.u32 [#allocation10], 4
      %s293 = int_to_ptr.vmem [resolvable:$true] %s292
      %s294 = sshll.u32 %s7, 4
      %s295 = int_to_ptr.hbm [resolvable:$true] %s294
      %297 = dma.vmem_to_hbm [thread:$0]  %s293, 128, %s295, [#allocation4]
    $region49: #{generator_forward_padded.1} parent=1 // pred_fallthru
      _
    // Predicated region
    $region50: #{generator_forward_padded.1} parent=1 // pred_check
      _
    $region51: #{generator_forward_padded.1} parent=1 // pred_check_branch
      %299 = sbr.rel (0) target = $region53
    $region52: #{generator_forward_padded.1} parent=1 // pred_region
      %301 = dma.done [#allocation4], 128
    $region53: #{generator_forward_padded.1} parent=1 // pred_fallthru
      _
    %302 = vsyncpa [#allocation3], 1
    %303 = vsyncpa [#allocation6], 1
    %304 = vsyncpa [#allocation9], 1
    %305 = vsyncpa [#allocation4], 1

</llo_original>
